<compile_context>
chip_gen: v7x
topology: tpu7x:2x2x1
jax: 0.10.0
libtpu: 0.0.40
codegen_flags: <defaults>
</compile_context>

<pallas_src>
import functools

import jax
import jax.numpy as jnp
from jax.experimental import pallas as pl
from jax.experimental.pallas import tpu as pltpu

_TILE_B = 1024  # max batch rows per grid step


def _round_up(x, m):
    return ((x + m - 1) // m) * m


def _silu(x):
    return x * jax.nn.sigmoid(x)


# ----------------------------------------------------------------------------
# Kernels
# ----------------------------------------------------------------------------
def _layer1(xa_ref, xb_ref, efpv_ref,
            w1a_ref, w1b_ref, w1c_ref, w1ep_ref, b1_ref):
    """Folded first linear layer: concat([xa, xb, xa-xb, ef, pv]) @ W1 + b1."""
    xa = xa_ref[...]
    xb = xb_ref[...]
    # Subtract in the input precision first (preserves cancellation), then cast.
    xd = (xa - xb).astype(jnp.bfloat16)
    xa = xa.astype(jnp.bfloat16)
    xb = xb.astype(jnp.bfloat16)
    ep = efpv_ref[...].astype(jnp.bfloat16)
    h1 = (jnp.dot(xa, w1a_ref[...], preferred_element_type=jnp.float32)
          + jnp.dot(xb, w1b_ref[...], preferred_element_type=jnp.float32)
          + jnp.dot(xd, w1c_ref[...], preferred_element_type=jnp.float32)
          + jnp.dot(ep, w1ep_ref[...], preferred_element_type=jnp.float32)
          + b1_ref[...])
    return h1                                                     # [B, h1] f32


def _ordtri_relu_kernel(xa_ref, xb_ref, efpv_ref,
                        w1a_ref, w1b_ref, w1c_ref, w1ep_ref, b1_ref,
                        w2_ref, b2_ref, w3_ref, b3_ref, o_ref):
    """Linear -> ReLU -> (Dropout=id) -> Linear -> ReLU -> (Dropout=id) -> Linear."""
    h1 = _layer1(xa_ref, xb_ref, efpv_ref,
                 w1a_ref, w1b_ref, w1c_ref, w1ep_ref, b1_ref)     # [B, 128] f32
    h1 = jnp.maximum(h1, 0.0).astype(jnp.bfloat16)
    h2 = (jnp.dot(h1, w2_ref[...], preferred_element_type=jnp.float32)
          + b2_ref[...])                                          # [B, 64] f32
    h2 = jnp.maximum(h2, 0.0).astype(jnp.bfloat16)
    o_ref[...] = (jnp.dot(h2, w3_ref[...], preferred_element_type=jnp.float32)
                  + b3_ref[...])                                  # [B, k] f32 (narrow)


def _ordtri_swiglu_kernel(xa_ref, xb_ref, efpv_ref,
                          w1a_ref, w1b_ref, w1c_ref, w1ep_ref, b1_ref,
                          w2a_ref, w2g_ref, b2a_ref, b2g_ref,
                          w3_ref, b3_ref, o_ref):
    """Linear(in,256) -> SwiGLU -> Linear(128,128) -> SwiGLU -> Linear(64,k)."""
    h1 = _layer1(xa_ref, xb_ref, efpv_ref,
                 w1a_ref, w1b_ref, w1c_ref, w1ep_ref, b1_ref)     # [B, 256] f32
    d1 = h1.shape[-1] // 2                                        # split at lane 128
    h1s = (h1[:, :d1] * _silu(h1[:, d1:])).astype(jnp.bfloat16)   # [B, 128]
    # Second layer: separate act / gate matmuls (no lane-64 slice needed).
    a2 = (jnp.dot(h1s, w2a_ref[...], preferred_element_type=jnp.float32)
          + b2a_ref[...])                                         # [B, 64]
    g2 = (jnp.dot(h1s, w2g_ref[...], preferred_element_type=jnp.float32)
          + b2g_ref[...])                                         # [B, 64]
    h2 = (a2 * _silu(g2)).astype(jnp.bfloat16)                    # [B, 64]
    o_ref[...] = (jnp.dot(h2, w3_ref[...], preferred_element_type=jnp.float32)
                  + b3_ref[...])                                  # [B, k] f32 (narrow)


# ----------------------------------------------------------------------------
# Wrapper
# ----------------------------------------------------------------------------
@functools.partial(jax.jit, static_argnames=("act",))
def ordtri_forward(xa, xb, edge_feats, probs_vec, params, act="relu"):
    """
    xa, xb     : [B, dim]   (any float dtype; bf16 inputs avoid the f32 read)
    edge_feats : [B, 6]
    probs_vec  : [B, 3*k]
    params     : dict with w1,b1,w2,b2,w3,b3 (weights stored as [in, out])
    returns    : [B, k] logits (f32)
    """
    if act not in ("relu", "swiglu"):
        raise ValueError("act must be 'relu' or 'swiglu'")

    B, dim = xa.shape
    e_w = edge_feats.shape[1]
    p_w = probs_vec.shape[1]
    ep_w = e_w + p_w
    k = params["w3"].shape[1]

    # Merge the two narrow feature streams into one operand (one DMA stream,
    # one MXU push, less lane-padded VMEM).  Cheap: B * (6 + 3k) elements.
    efpv = jnp.concatenate([edge_feats, probs_vec], axis=-1)

    # --- split W1 by feature block (no lossy weight folding) -----------------
    w1 = params["w1"]                              # [3*dim + 6 + 3k, h1]
    w1a = w1[:dim].astype(jnp.bfloat16)            # xa coef
    w1b = w1[dim:2 * dim].astype(jnp.bfloat16)     # xb coef
    w1c = w1[2 * dim:3 * dim].astype(jnp.bfloat16)  # (xa - xb) coef
    w1ep = w1[3 * dim:].astype(jnp.bfloat16)       # [ef | pv] coef
    b1 = params["b1"].astype(jnp.float32)

    w3 = params["w3"].astype(jnp.bfloat16)         # [64, k] (narrow output, no pad)
    b3 = params["b3"].astype(jnp.float32)          # [1, k]

    if act == "relu":
        kernel = _ordtri_relu_kernel
        w2 = params["w2"].astype(jnp.bfloat16)
        b2 = params["b2"].astype(jnp.float32)
        weights = (w1a, w1b, w1c, w1ep, b1, w2, b2, w3, b3)
    else:
        kernel = _ordtri_swiglu_kernel
        w2 = params["w2"]
        h2_half = w2.shape[1] // 2
        w2a = w2[:, :h2_half].astype(jnp.bfloat16)
        w2g = w2[:, h2_half:].astype(jnp.bfloat16)
        b2a = params["b2"][:, :h2_half].astype(jnp.float32)
        b2g = params["b2"][:, h2_half:].astype(jnp.float32)
        weights = (w1a, w1b, w1c, w1ep, b1, w2a, w2g, b2a, b2g, w3, b3)

    # --- batch grid: aim for >= ~4 steps when B is large (2 TCs on v7x),
    #     keep tile a multiple of 8 sublanes, cap at _TILE_B for VMEM. --------
    tile_b = min(_TILE_B, max(8, _round_up(pl.cdiv(B, 4), 8)))
    grid = (pl.cdiv(B, tile_b),)

    def act_spec(width):
        return pl.BlockSpec((tile_b, width), lambda i: (i, 0))

    def resident(arr):  # weights/biases: same block every grid step -> stay in VMEM
        return pl.BlockSpec(arr.shape, lambda i: (0, 0))

    in_specs = ([act_spec(dim), act_spec(dim), act_spec(ep_w)]
                + [resident(w) for w in weights])
    # Narrow, unpadded output: block last dim == full array dim (k) -> legal,
    # removes the padded writeback and the wrapper-side [:, :k] slice pass.
    out_specs = pl.BlockSpec((tile_b, k), lambda i: (i, 0))

    # Advisory cost estimate for XLA scheduling.
    h1_dim = params["w1"].shape[1]
    h2_in, h2_out = params["w2"].shape
    flops = 2 * B * ((3 * dim + ep_w) * h1_dim + h2_in * h2_out + w3.shape[0] * k)
    transcendentals = 0 if act == "relu" else B * (h1_dim // 2 + h2_out // 2)
    w_bytes = 2 * sum(int(v.size) for v in params.values())
    act_bytes = (B * (2 * dim) * xa.dtype.itemsize
                 + B * ep_w * efpv.dtype.itemsize
                 + B * k * 4)
    bytes_accessed = act_bytes + w_bytes

    out = pl.pallas_call(
        kernel,
        grid=grid,
        out_shape=jax.ShapeDtypeStruct((B, k), jnp.float32),
        in_specs=in_specs,
        out_specs=out_specs,
        compiler_params=pltpu.CompilerParams(
            dimension_semantics=("parallel",),
            vmem_limit_bytes=32 * 1024 * 1024,
        ),
        cost_estimate=pl.CostEstimate(
            flops=flops,
            transcendentals=transcendentals,
            bytes_accessed=bytes_accessed,
        ),
    )(xa, xb, efpv, *weights)

    return out


# ----------------------------------------------------------------------------
# Deterministic parameter init (synthetic; no checkpoint loading)
# ----------------------------------------------------------------------------
def init_params(key, dim, k, act="relu"):
    in_dim = dim * 3 + 6 + 3 * k
    if act == "relu":
        dims = [(in_dim, 128), (128, 64), (64, k)]
    else:  # swiglu
        dims = [(in_dim, 128 * 2), (128, 64 * 2), (64, k)]
    params = {}
    keys = jax.random.split(key, 2 * len(dims))
    for i, (din, dout) in enumerate(dims):
        scale = 1.0 / jnp.sqrt(jnp.float32(din))
        params[f"w{i+1}"] = (
            jax.random.uniform(keys[2 * i], (din, dout), jnp.float32, -1.0, 1.0)
            * scale)
        # biases kept 2D [1, dout] so they live cleanly on the (sublane, lane) grid
        params[f"b{i+1}"] = (
            jax.random.uniform(keys[2 * i + 1], (1, dout), jnp.float32, -1.0, 1.0)
            * scale)
    return params


def _swiglu_ref(h):
    d = h.shape[-1] // 2
    return h[:, :d] * (h[:, d:] * jax.nn.sigmoid(h[:, d:]))


# Pure-JAX f32 reference for correctness check.
def ordtri_ref(xa, xb, edge_feats, probs_vec, params, act="relu"):
    x = jnp.concatenate([xa, xb, xa - xb, edge_feats, probs_vec], axis=-1)
    x = x.astype(jnp.float32)
    h1 = x @ params["w1"] + params["b1"]
    h1 = jnp.maximum(h1, 0.0) if act == "relu" else _swiglu_ref(h1)
    h2 = h1 @ params["w2"] + params["b2"]
    h2 = jnp.maximum(h2, 0.0) if act == "relu" else _swiglu_ref(h2)
    return h2 @ params["w3"] + params["b3"]


# ----------------------------------------------------------------------------
if __name__ == "__main__":
    B, dim, k = 8, 32, 4

    key = jax.random.PRNGKey(0)
    k_xa, k_xb, k_ef, k_pv, k_p_relu, k_p_sw = jax.random.split(key, 6)

    xa = jax.random.normal(k_xa, (B, dim), jnp.float32)
    xb = jax.random.normal(k_xb, (B, dim), jnp.float32)
    edge_feats = jax.random.normal(k_ef, (B, 6), jnp.float32)
    probs_vec = jax.random.uniform(k_pv, (B, 3 * k), jnp.float32)

    ok = True
    for act, pkey in (("relu", k_p_relu), ("swiglu", k_p_sw)):
        params = init_params(pkey, dim, k, act=act)
        out = ordtri_forward(xa, xb, edge_feats, probs_vec, params, act=act)
        out = jax.block_until_ready(out)
        ref = ordtri_ref(xa, xb, edge_feats, probs_vec, params, act=act)
        if out.shape != (B, k):
            ok = False
        # bf16 matmul operands with f32 accumulation -> relaxed tolerance vs f32 ref
        if not jnp.allclose(out, ref, atol=5e-2, rtol=5e-2):
            ok = False

    if ok:
        print("KERNEL_OK")
</pallas_src>

<mosaic_0001>
module attributes {stable_mosaic.version = 11 : i64} {
  func.func @_ordtri_relu_kernel(%arg0: i32, %arg1: memref<8x32xf32, #tpu.memory_space<vmem>>, %arg2: memref<8x32xf32, #tpu.memory_space<vmem>>, %arg3: memref<8x18xf32, #tpu.memory_space<vmem>>, %arg4: memref<32x128xbf16, #tpu.memory_space<vmem>>, %arg5: memref<32x128xbf16, #tpu.memory_space<vmem>>, %arg6: memref<32x128xbf16, #tpu.memory_space<vmem>>, %arg7: memref<18x128xbf16, #tpu.memory_space<vmem>>, %arg8: memref<1x128xf32, #tpu.memory_space<vmem>>, %arg9: memref<128x64xbf16, #tpu.memory_space<vmem>>, %arg10: memref<1x64xf32, #tpu.memory_space<vmem>>, %arg11: memref<64x4xbf16, #tpu.memory_space<vmem>>, %arg12: memref<1x4xf32, #tpu.memory_space<vmem>>, %arg13: memref<8x4xf32, #tpu.memory_space<vmem>>) attributes {dimension_semantics = [#tpu.dimension_semantics<parallel>], iteration_bounds = array<i64: 1>, scalar_prefetch = 0 : i64, scratch_operands = 0 : i64, tpu.core_type = #tpu.core_type<tc>, window_params = [{transform_indices = @transform_0, window_bounds = array<i64: 8, 32>}, {transform_indices = @transform_1, window_bounds = array<i64: 8, 32>}, {transform_indices = @transform_2, window_bounds = array<i64: 8, 18>}, {pipeline_mode = #tpu.pipeline_mode<synchronous>, transform_indices = @transform_3, window_bounds = array<i64: 32, 128>}, {pipeline_mode = #tpu.pipeline_mode<synchronous>, transform_indices = @transform_4, window_bounds = array<i64: 32, 128>}, {pipeline_mode = #tpu.pipeline_mode<synchronous>, transform_indices = @transform_5, window_bounds = array<i64: 32, 128>}, {pipeline_mode = #tpu.pipeline_mode<synchronous>, transform_indices = @transform_6, window_bounds = array<i64: 18, 128>}, {pipeline_mode = #tpu.pipeline_mode<synchronous>, transform_indices = @transform_7, window_bounds = array<i64: 1, 128>}, {pipeline_mode = #tpu.pipeline_mode<synchronous>, transform_indices = @transform_8, window_bounds = array<i64: 128, 64>}, {pipeline_mode = #tpu.pipeline_mode<synchronous>, transform_indices = @transform_9, window_bounds = array<i64: 1, 64>}, {pipeline_mode = #tpu.pipeline_mode<synchronous>, transform_indices = @transform_10, window_bounds = array<i64: 64, 4>}, {pipeline_mode = #tpu.pipeline_mode<synchronous>, transform_indices = @transform_11, window_bounds = array<i64: 1, 4>}, {transform_indices = @transform_12, window_bounds = array<i64: 8, 4>}]} {
    %c0 = arith.constant 0 : index
    %c0_0 = arith.constant 0 : index
    %0 = vector.load %arg1[%c0, %c0_0] : memref<8x32xf32, #tpu.memory_space<vmem>>, vector<8x32xf32>
    %c0_1 = arith.constant 0 : index
    %c0_2 = arith.constant 0 : index
    %1 = vector.load %arg2[%c0_1, %c0_2] : memref<8x32xf32, #tpu.memory_space<vmem>>, vector<8x32xf32>
    %2 = arith.subf %0, %1 : vector<8x32xf32>
    %3 = arith.truncf %2 : vector<8x32xf32> to vector<8x32xbf16>
    %4 = arith.truncf %0 : vector<8x32xf32> to vector<8x32xbf16>
    %5 = arith.truncf %1 : vector<8x32xf32> to vector<8x32xbf16>
    %c0_3 = arith.constant 0 : index
    %c0_4 = arith.constant 0 : index
    %6 = vector.load %arg3[%c0_3, %c0_4] : memref<8x18xf32, #tpu.memory_space<vmem>>, vector<8x18xf32>
    %7 = arith.truncf %6 : vector<8x18xf32> to vector<8x18xbf16>
    %c0_5 = arith.constant 0 : index
    %c0_6 = arith.constant 0 : index
    %8 = vector.load %arg4[%c0_5, %c0_6] : memref<32x128xbf16, #tpu.memory_space<vmem>>, vector<32x128xbf16>
    %cst = arith.constant dense<0.000000e+00> : vector<8x128xf32>
    %9 = tpu.matmul %4, %8, %cst {dimension_numbers = #tpu.dot_dimension_numbers<[1], [0], [0], [1], [0, 0, 1, 1], [], []>} : vector<8x32xbf16>, vector<32x128xbf16>, vector<8x128xf32> -> vector<8x128xf32>
    %c0_7 = arith.constant 0 : index
    %c0_8 = arith.constant 0 : index
    %10 = vector.load %arg5[%c0_7, %c0_8] : memref<32x128xbf16, #tpu.memory_space<vmem>>, vector<32x128xbf16>
    %cst_9 = arith.constant dense<0.000000e+00> : vector<8x128xf32>
    %11 = tpu.matmul %5, %10, %cst_9 {dimension_numbers = #tpu.dot_dimension_numbers<[1], [0], [0], [1], [0, 0, 1, 1], [], []>} : vector<8x32xbf16>, vector<32x128xbf16>, vector<8x128xf32> -> vector<8x128xf32>
    %12 = arith.addf %9, %11 : vector<8x128xf32>
    %c0_10 = arith.constant 0 : index
    %c0_11 = arith.constant 0 : index
    %13 = vector.load %arg6[%c0_10, %c0_11] : memref<32x128xbf16, #tpu.memory_space<vmem>>, vector<32x128xbf16>
    %cst_12 = arith.constant dense<0.000000e+00> : vector<8x128xf32>
    %14 = tpu.matmul %3, %13, %cst_12 {dimension_numbers = #tpu.dot_dimension_numbers<[1], [0], [0], [1], [0, 0, 1, 1], [], []>} : vector<8x32xbf16>, vector<32x128xbf16>, vector<8x128xf32> -> vector<8x128xf32>
    %15 = arith.addf %12, %14 : vector<8x128xf32>
    %c0_13 = arith.constant 0 : index
    %c0_14 = arith.constant 0 : index
    %16 = vector.load %arg7[%c0_13, %c0_14] : memref<18x128xbf16, #tpu.memory_space<vmem>>, vector<18x128xbf16>
    %cst_15 = arith.constant dense<0.000000e+00> : vector<8x128xf32>
    %17 = tpu.matmul %7, %16, %cst_15 {dimension_numbers = #tpu.dot_dimension_numbers<[1], [0], [0], [1], [0, 0, 1, 1], [], []>} : vector<8x18xbf16>, vector<18x128xbf16>, vector<8x128xf32> -> vector<8x128xf32>
    %18 = arith.addf %15, %17 : vector<8x128xf32>
    %c0_16 = arith.constant 0 : index
    %c0_17 = arith.constant 0 : index
    %19 = vector.load %arg8[%c0_16, %c0_17] : memref<1x128xf32, #tpu.memory_space<vmem>>, vector<1x128xf32>
    %20 = vector.broadcast %19 : vector<1x128xf32> to vector<8x128xf32>
    %21 = arith.addf %18, %20 : vector<8x128xf32>
    %cst_18 = arith.constant 0.000000e+00 : f32
    %22 = vector.broadcast %cst_18 : f32 to vector<8x128xf32>
    %23 = arith.maximumf %21, %22 : vector<8x128xf32>
    %24 = arith.truncf %23 : vector<8x128xf32> to vector<8x128xbf16>
    %c0_19 = arith.constant 0 : index
    %c0_20 = arith.constant 0 : index
    %25 = vector.load %arg9[%c0_19, %c0_20] : memref<128x64xbf16, #tpu.memory_space<vmem>>, vector<128x64xbf16>
    %cst_21 = arith.constant dense<0.000000e+00> : vector<8x64xf32>
    %26 = tpu.matmul %24, %25, %cst_21 {dimension_numbers = #tpu.dot_dimension_numbers<[1], [0], [0], [1], [0, 0, 1, 1], [], []>} : vector<8x128xbf16>, vector<128x64xbf16>, vector<8x64xf32> -> vector<8x64xf32>
    %c0_22 = arith.constant 0 : index
    %c0_23 = arith.constant 0 : index
    %27 = vector.load %arg10[%c0_22, %c0_23] : memref<1x64xf32, #tpu.memory_space<vmem>>, vector<1x64xf32>
    %28 = vector.broadcast %27 : vector<1x64xf32> to vector<8x64xf32>
    %29 = arith.addf %26, %28 : vector<8x64xf32>
    %cst_24 = arith.constant 0.000000e+00 : f32
    %30 = vector.broadcast %cst_24 : f32 to vector<8x64xf32>
    %31 = arith.maximumf %29, %30 : vector<8x64xf32>
    %32 = arith.truncf %31 : vector<8x64xf32> to vector<8x64xbf16>
    %c0_25 = arith.constant 0 : index
    %c0_26 = arith.constant 0 : index
    %33 = vector.load %arg11[%c0_25, %c0_26] : memref<64x4xbf16, #tpu.memory_space<vmem>>, vector<64x4xbf16>
    %cst_27 = arith.constant dense<0.000000e+00> : vector<8x4xf32>
    %34 = tpu.matmul %32, %33, %cst_27 {dimension_numbers = #tpu.dot_dimension_numbers<[1], [0], [0], [1], [0, 0, 1, 1], [], []>} : vector<8x64xbf16>, vector<64x4xbf16>, vector<8x4xf32> -> vector<8x4xf32>
    %c0_28 = arith.constant 0 : index
    %c0_29 = arith.constant 0 : index
    %35 = vector.load %arg12[%c0_28, %c0_29] : memref<1x4xf32, #tpu.memory_space<vmem>>, vector<1x4xf32>
    %36 = vector.broadcast %35 : vector<1x4xf32> to vector<8x4xf32>
    %37 = arith.addf %34, %36 : vector<8x4xf32>
    %c0_30 = arith.constant 0 : index
    %c0_31 = arith.constant 0 : index
    %38 = vector.load %arg13[%c0_30, %c0_31] : memref<8x4xf32, #tpu.memory_space<vmem>>, vector<8x4xf32>
    tpu.vector_store %arg13[%c0_30, %c0_31], %37 {strides = array<i32>} : memref<8x4xf32, #tpu.memory_space<vmem>>, vector<8x4xf32>,
    return
  }
  func.func @transform_0(%arg0: i32) -> (i32, i32) {
    %c0_i32 = arith.constant 0 : i32
    %c0_i32_0 = arith.constant 0 : i32
    return %arg0, %c0_i32 : i32, i32
  }
  func.func @transform_1(%arg0: i32) -> (i32, i32) {
    %c0_i32 = arith.constant 0 : i32
    %c0_i32_0 = arith.constant 0 : i32
    return %arg0, %c0_i32 : i32, i32
  }
  func.func @transform_2(%arg0: i32) -> (i32, i32) {
    %c0_i32 = arith.constant 0 : i32
    %c0_i32_0 = arith.constant 0 : i32
    return %arg0, %c0_i32 : i32, i32
  }
  func.func @transform_3(%arg0: i32) -> (i32, i32) {
    %c0_i32 = arith.constant 0 : i32
    %c0_i32_0 = arith.constant 0 : i32
    %c0_i32_1 = arith.constant 0 : i32
    return %c0_i32, %c0_i32_0 : i32, i32
  }
  func.func @transform_4(%arg0: i32) -> (i32, i32) {
    %c0_i32 = arith.constant 0 : i32
    %c0_i32_0 = arith.constant 0 : i32
    %c0_i32_1 = arith.constant 0 : i32
    return %c0_i32, %c0_i32_0 : i32, i32
  }
  func.func @transform_5(%arg0: i32) -> (i32, i32) {
    %c0_i32 = arith.constant 0 : i32
    %c0_i32_0 = arith.constant 0 : i32
    %c0_i32_1 = arith.constant 0 : i32
    return %c0_i32, %c0_i32_0 : i32, i32
  }
  func.func @transform_6(%arg0: i32) -> (i32, i32) {
    %c0_i32 = arith.constant 0 : i32
    %c0_i32_0 = arith.constant 0 : i32
    %c0_i32_1 = arith.constant 0 : i32
    return %c0_i32, %c0_i32_0 : i32, i32
  }
  func.func @transform_7(%arg0: i32) -> (i32, i32) {
    %c0_i32 = arith.constant 0 : i32
    %c0_i32_0 = arith.constant 0 : i32
    %c0_i32_1 = arith.constant 0 : i32
    return %c0_i32, %c0_i32_0 : i32, i32
  }
  func.func @transform_8(%arg0: i32) -> (i32, i32) {
    %c0_i32 = arith.constant 0 : i32
    %c0_i32_0 = arith.constant 0 : i32
    %c0_i32_1 = arith.constant 0 : i32
    return %c0_i32, %c0_i32_0 : i32, i32
  }
  func.func @transform_9(%arg0: i32) -> (i32, i32) {
    %c0_i32 = arith.constant 0 : i32
    %c0_i32_0 = arith.constant 0 : i32
    %c0_i32_1 = arith.constant 0 : i32
    return %c0_i32, %c0_i32_0 : i32, i32
  }
  func.func @transform_10(%arg0: i32) -> (i32, i32) {
    %c0_i32 = arith.constant 0 : i32
    %c0_i32_0 = arith.constant 0 : i32
    %c0_i32_1 = arith.constant 0 : i32
    return %c0_i32, %c0_i32_0 : i32, i32
  }
  func.func @transform_11(%arg0: i32) -> (i32, i32) {
    %c0_i32 = arith.constant 0 : i32
    %c0_i32_0 = arith.constant 0 : i32
    %c0_i32_1 = arith.constant 0 : i32
    return %c0_i32, %c0_i32_0 : i32, i32
  }
  func.func @transform_12(%arg0: i32) -> (i32, i32) {
    %c0_i32 = arith.constant 0 : i32
    %c0_i32_0 = arith.constant 0 : i32
    return %arg0, %c0_i32 : i32, i32
  }
}

</mosaic_0001>

<llo_original>
// kernel: ordtri_forward.1
$region0: #{ordtri_forward.1}
  #allocation0 [shape = 'u32[]', space=smem, size = 0x4, offset = 0x4, fixed_abs, tag = 'smem constant byte address 0x4 - core index']
  #allocation1 [shape = 'u32[144,128]{1,0:T(1,128)}', space=vmem, size = 0x12000, scoped, tag = 'internal scratch']
  %s0 = inlined_call_operand.vmem [shape: f32[8,32], index: 0, kind: input, shape index: {}]
  %s1 = inlined_call_operand.vmem [shape: f32[8,32], index: 1, kind: input, shape index: {}]
  %s2 = inlined_call_operand.vmem [shape: f32[8,18], index: 2, kind: input, shape index: {}]
  %s3 = inlined_call_operand.vmem [shape: bf16[32,128], index: 3, kind: input, shape index: {}]
  %s4 = inlined_call_operand.vmem [shape: bf16[32,128], index: 4, kind: input, shape index: {}]
  %s5 = inlined_call_operand.vmem [shape: bf16[32,128], index: 5, kind: input, shape index: {}]
  %s6 = inlined_call_operand.vmem [shape: bf16[18,128], index: 6, kind: input, shape index: {}]
  %s7 = inlined_call_operand.vmem [shape: f32[1,128], index: 7, kind: input, shape index: {}]
  %s8 = inlined_call_operand.vmem [shape: bf16[128,64], index: 8, kind: input, shape index: {}]
  %s9 = inlined_call_operand.vmem [shape: f32[1,64], index: 9, kind: input, shape index: {}]
  %s10 = inlined_call_operand.vmem [shape: bf16[64,4], index: 10, kind: input, shape index: {}]
  %s11 = inlined_call_operand.vmem [shape: f32[1,4], index: 11, kind: input, shape index: {}]
  %s12 = inlined_call_operand.vmem [shape: f32[8,4], index: 12, kind: output, shape index: {}]
  %s13 = sld [smem:[#allocation0]]
  $region58: #{ordtri_forward.1} parent=0
    _
  %s15 = ssub.s32 1, %s13
  %s16 = scalar_select 0, %s15, %s13
  // Predicated region
  $region2: #{ordtri_forward.1} parent=0 // pred_check
    _
  $region3: #{ordtri_forward.1} parent=0 // pred_check_branch
    %18 = sbr.rel (0) target = $region5
  $region4: #{ordtri_forward.1} parent=0 // pred_region
    _
  $region5: #{ordtri_forward.1} parent=0 // pred_fallthru
    _
  // Predicated region
  $region6: #{ordtri_forward.1} parent=0 // pred_check
    _
  $region7: #{ordtri_forward.1} parent=0 // pred_check_branch
    %20 = sbr.rel (0) target = $region9
  $region8: #{ordtri_forward.1} parent=0 // pred_region
    _
  $region9: #{ordtri_forward.1} parent=0 // pred_fallthru
    _
  // Predicated region
  $region10: #{ordtri_forward.1} parent=0 // pred_check
    _
  $region11: #{ordtri_forward.1} parent=0 // pred_check_branch
    %22 = sbr.rel (0) target = $region13
  $region12: #{ordtri_forward.1} parent=0 // pred_region
    _
  $region13: #{ordtri_forward.1} parent=0 // pred_fallthru
    _
  // Predicated region
  $region14: #{ordtri_forward.1} parent=0 // pred_check
    _
  $region15: #{ordtri_forward.1} parent=0 // pred_check_branch
    %24 = sbr.rel (0) target = $region17
  $region16: #{ordtri_forward.1} parent=0 // pred_region
    _
  $region17: #{ordtri_forward.1} parent=0 // pred_fallthru
    _
  // Predicated region
  $region18: #{ordtri_forward.1} parent=0 // pred_check
    _
  $region19: #{ordtri_forward.1} parent=0 // pred_check_branch
    %26 = sbr.rel (0) target = $region21
  $region20: #{ordtri_forward.1} parent=0 // pred_region
    _
  $region21: #{ordtri_forward.1} parent=0 // pred_fallthru
    _
  // Predicated region
  $region22: #{ordtri_forward.1} parent=0 // pred_check
    _
  $region23: #{ordtri_forward.1} parent=0 // pred_check_branch
    %28 = sbr.rel (0) target = $region25
  $region24: #{ordtri_forward.1} parent=0 // pred_region
    _
  $region25: #{ordtri_forward.1} parent=0 // pred_fallthru
    _
  // Predicated region
  $region26: #{ordtri_forward.1} parent=0 // pred_check
    _
  $region27: #{ordtri_forward.1} parent=0 // pred_check_branch
    %30 = sbr.rel (0) target = $region29
  $region28: #{ordtri_forward.1} parent=0 // pred_region
    _
  $region29: #{ordtri_forward.1} parent=0 // pred_fallthru
    _
  // Predicated region
  $region30: #{ordtri_forward.1} parent=0 // pred_check
    _
  $region31: #{ordtri_forward.1} parent=0 // pred_check_branch
    %32 = sbr.rel (0) target = $region33
  $region32: #{ordtri_forward.1} parent=0 // pred_region
    _
  $region33: #{ordtri_forward.1} parent=0 // pred_fallthru
    _
  // Predicated region
  $region34: #{ordtri_forward.1} parent=0 // pred_check
    _
  $region35: #{ordtri_forward.1} parent=0 // pred_check_branch
    %34 = sbr.rel (0) target = $region37
  $region36: #{ordtri_forward.1} parent=0 // pred_region
    _
  $region37: #{ordtri_forward.1} parent=0 // pred_fallthru
    _
  // Predicated region
  $region38: #{ordtri_forward.1} parent=0 // pred_check
    _
  $region39: #{ordtri_forward.1} parent=0 // pred_check_branch
    %36 = sbr.rel (0) target = $region41
  $region40: #{ordtri_forward.1} parent=0 // pred_region
    _
  $region41: #{ordtri_forward.1} parent=0 // pred_fallthru
    _
  // Predicated region
  $region42: #{ordtri_forward.1} parent=0 // pred_check
    _
  $region43: #{ordtri_forward.1} parent=0 // pred_check_branch
    %38 = sbr.rel (0) target = $region45
  $region44: #{ordtri_forward.1} parent=0 // pred_region
    _
  $region45: #{ordtri_forward.1} parent=0 // pred_fallthru
    _
  // Predicated region
  $region46: #{ordtri_forward.1} parent=0 // pred_check
    _
  $region47: #{ordtri_forward.1} parent=0 // pred_check_branch
    %40 = sbr.rel (0) target = $region49
  $region48: #{ordtri_forward.1} parent=0 // pred_region
    _
  $region49: #{ordtri_forward.1} parent=0 // pred_fallthru
    _
  %v42 = vld [vmem:[%s0] sm:$0xff]
  %v43 = vld [vmem:[%s1] sm:$0xff]
  %v44 = vsub.f32 %v42, %v43
  %v45 = vpack.c.bf16 %v44, %v44
  %v46 = vpack.c.bf16 %v42, %v42
  %v47 = vpack.c.bf16 %v43, %v43
  %v48 = vld [vmem:[%s2] sm:$0xff]
  %v49 = vpack.c.bf16 %v48, %v48
  %v50 = vld [vmem:[%s3] sm:$0xf]
  %v51 = vld [vmem:[%s3 + $0x4] sm:$0xf]
  %v52 = vld [vmem:[%s3 + $0x8] sm:$0xf]
  %v53 = vld [vmem:[%s3 + $0xc] sm:$0xf]
  %v54 = vld [vmem:[%s4] sm:$0xf]
  %v55 = vld [vmem:[%s4 + $0x4] sm:$0xf]
  %v56 = vld [vmem:[%s4 + $0x8] sm:$0xf]
  %v57 = vld [vmem:[%s4 + $0xc] sm:$0xf]
  %v62 = vunpack.c.l.b16 %v54
  %v63 = vunpack.c.l.b16 %v55
  %v64 = vunpack.c.l.b16 %v56
  %v65 = vunpack.c.l.b16 %v57
  %v66 = vpack.c.b16 %v63, %v62
  %v67 = vpack.c.b16 %v65, %v64
  %vm70 = vcmask 261120
  %v72 = vsel %vm70, %v47, 0
  %74 = vmatprep.subr.bf16.mxu0 0
  %75 = vmatpush1.bf16.msra.mxu0 %v66
  %76 = vmatprep.subr.bf16.mxu0 0
  %77 = vmatpush1.bf16.msra.mxu0 %v67
  %78 = vmatprep.subr.bf16.mxu0 0
  %79 = vmatpush1.bf16.msra.mxu0 0
  %80 = vmatprep.subr.bf16.mxu0 0
  %81 = vmatpush1.bf16.msra.mxu0 0
  %82 = vmatprep.subr.bf16.mxu0 0
  %83 = vmatpush1.bf16.msra.mxu0 0
  %84 = vmatprep.subr.bf16.mxu0 0
  %85 = vmatpush1.bf16.msra.mxu0 0
  %86 = vmatprep.subr.bf16.mxu0 0
  %87 = vmatpush1.bf16.msra.mxu0 0
  %88 = vmatprep.subr.bf16.mxu0 0
  %89 = vmatpush1.bf16.msra.mxu0 0
  %90 = vmatprep.subr.bf16.mxu0 0
  %91 = vmatpush1.bf16.msra.mxu0 0
  %92 = vmatprep.subr.bf16.mxu0 0
  %93 = vmatpush1.bf16.msra.mxu0 0
  %94 = vmatprep.subr.bf16.mxu0 0
  %95 = vmatpush1.bf16.msra.mxu0 0
  %96 = vmatprep.subr.bf16.mxu0 0
  %97 = vmatpush1.bf16.msra.mxu0 0
  %98 = vmatprep.subr.bf16.mxu0 0
  %99 = vmatpush1.bf16.msra.mxu0 0
  %100 = vmatprep.subr.bf16.mxu0 0
  %101 = vmatpush1.bf16.msra.mxu0 0
  %102 = vmatprep.subr.bf16.mxu0 0
  %103 = vmatpush1.bf16.msra.mxu0 0
  %104 = vmatprep.subr.bf16.mxu0 0
  %105 = vmatpush1.bf16.msra.mxu0 0
  %106 = vmatprep.mubr.bf16.mxu0 0
  %107 = vmatmul.mubr.bf16.gmra.mrb[0].mxu0 %v72
  %v108 = vpop.f32.mrb[0].mxu0
  %v109 = vadd.f32 0.0, %v108
  %v110 = vpop.f32.mrb[0].mxu0
  %v111 = vpop.f32.mrb[0].mxu0
  %v112 = vpop.f32.mrb[0].mxu0
  %113 = vdwg.mxu0
  %v118 = vunpack.c.l.b16 %v50
  %v119 = vunpack.c.l.b16 %v51
  %v120 = vunpack.c.l.b16 %v52
  %v121 = vunpack.c.l.b16 %v53
  %v122 = vpack.c.b16 %v119, %v118
  %v123 = vpack.c.b16 %v121, %v120
  %v127 = vsel %vm70, %v46, 0
  %129 = vmatprep.subr.bf16.mxu0 0
  %130 = vmatpush1.bf16.msra.mxu0 %v122
  %131 = vmatprep.subr.bf16.mxu0 0
  %132 = vmatpush1.bf16.msra.mxu0 %v123
  %133 = vmatprep.subr.bf16.mxu0 0
  %134 = vmatpush1.bf16.msra.mxu0 0
  %135 = vmatprep.subr.bf16.mxu0 0
  %136 = vmatpush1.bf16.msra.mxu0 0
  %137 = vmatprep.subr.bf16.mxu0 0
  %138 = vmatpush1.bf16.msra.mxu0 0
  %139 = vmatprep.subr.bf16.mxu0 0
  %140 = vmatpush1.bf16.msra.mxu0 0
  %141 = vmatprep.subr.bf16.mxu0 0
  %142 = vmatpush1.bf16.msra.mxu0 0
  %143 = vmatprep.subr.bf16.mxu0 0
  %144 = vmatpush1.bf16.msra.mxu0 0
  %145 = vmatprep.subr.bf16.mxu0 0
  %146 = vmatpush1.bf16.msra.mxu0 0
  %147 = vmatprep.subr.bf16.mxu0 0
  %148 = vmatpush1.bf16.msra.mxu0 0
  %149 = vmatprep.subr.bf16.mxu0 0
  %150 = vmatpush1.bf16.msra.mxu0 0
  %151 = vmatprep.subr.bf16.mxu0 0
  %152 = vmatpush1.bf16.msra.mxu0 0
  %153 = vmatprep.subr.bf16.mxu0 0
  %154 = vmatpush1.bf16.msra.mxu0 0
  %155 = vmatprep.subr.bf16.mxu0 0
  %156 = vmatpush1.bf16.msra.mxu0 0
  %157 = vmatprep.subr.bf16.mxu0 0
  %158 = vmatpush1.bf16.msra.mxu0 0
  %159 = vmatprep.subr.bf16.mxu0 0
  %160 = vmatpush1.bf16.msra.mxu0 0
  %161 = vmatprep.mubr.bf16.mxu0 0
  %162 = vmatmul.mubr.bf16.gmra.mrb[0].mxu0 %v127
  %v163 = vpop.f32.mrb[0].mxu0
  %v164 = vadd.f32 %v109, %v163
  %v165 = vpop.f32.mrb[0].mxu0
  %v166 = vpop.f32.mrb[0].mxu0
  %v167 = vpop.f32.mrb[0].mxu0
  %168 = vdwg.mxu0
  %v169 = vld [vmem:[%s5] sm:$0xf]
  %v170 = vld [vmem:[%s5 + $0x4] sm:$0xf]
  %v171 = vld [vmem:[%s5 + $0x8] sm:$0xf]
  %v172 = vld [vmem:[%s5 + $0xc] sm:$0xf]
  %v177 = vunpack.c.l.b16 %v169
  %v178 = vunpack.c.l.b16 %v170
  %v179 = vunpack.c.l.b16 %v171
  %v180 = vunpack.c.l.b16 %v172
  %v181 = vpack.c.b16 %v178, %v177
  %v182 = vpack.c.b16 %v180, %v179
  %v186 = vsel %vm70, %v45, 0
  %188 = vmatprep.subr.bf16.mxu0 0
  %189 = vmatpush1.bf16.msra.mxu0 %v181
  %190 = vmatprep.subr.bf16.mxu0 0
  %191 = vmatpush1.bf16.msra.mxu0 %v182
  %192 = vmatprep.subr.bf16.mxu0 0
  %193 = vmatpush1.bf16.msra.mxu0 0
  %194 = vmatprep.subr.bf16.mxu0 0
  %195 = vmatpush1.bf16.msra.mxu0 0
  %196 = vmatprep.subr.bf16.mxu0 0
  %197 = vmatpush1.bf16.msra.mxu0 0
  %198 = vmatprep.subr.bf16.mxu0 0
  %199 = vmatpush1.bf16.msra.mxu0 0
  %200 = vmatprep.subr.bf16.mxu0 0
  %201 = vmatpush1.bf16.msra.mxu0 0
  %202 = vmatprep.subr.bf16.mxu0 0
  %203 = vmatpush1.bf16.msra.mxu0 0
  %204 = vmatprep.subr.bf16.mxu0 0
  %205 = vmatpush1.bf16.msra.mxu0 0
  %206 = vmatprep.subr.bf16.mxu0 0
  %207 = vmatpush1.bf16.msra.mxu0 0
  %208 = vmatprep.subr.bf16.mxu0 0
  %209 = vmatpush1.bf16.msra.mxu0 0
  %210 = vmatprep.subr.bf16.mxu0 0
  %211 = vmatpush1.bf16.msra.mxu0 0
  %212 = vmatprep.subr.bf16.mxu0 0
  %213 = vmatpush1.bf16.msra.mxu0 0
  %214 = vmatprep.subr.bf16.mxu0 0
  %215 = vmatpush1.bf16.msra.mxu0 0
  %216 = vmatprep.subr.bf16.mxu0 0
  %217 = vmatpush1.bf16.msra.mxu0 0
  %218 = vmatprep.subr.bf16.mxu0 0
  %219 = vmatpush1.bf16.msra.mxu0 0
  %220 = vmatprep.mubr.bf16.mxu0 0
  %221 = vmatmul.mubr.bf16.gmra.mrb[0].mxu0 %v186
  %v222 = vpop.f32.mrb[0].mxu0
  %v223 = vadd.f32 0.0, %v222
  %v224 = vpop.f32.mrb[0].mxu0
  %v225 = vpop.f32.mrb[0].mxu0
  %v226 = vpop.f32.mrb[0].mxu0
  %227 = vdwg.mxu0
  %v228 = vadd.f32 %v164, %v223
  %v229 = vld [vmem:[%s6] sm:$0xf]
  %v230 = vld [vmem:[%s6 + $0x4] sm:$0xf]
  %v231 = vld [vmem:[%s6 + $0x8] sm:$0x1]
  %v235 = vunpack.c.l.b16 %v229
  %v236 = vunpack.c.l.b16 %v230
  %v237 = vunpack.c.l.b16 %v231
  %v238 = vpack.c.b16 %v236, %v235
  %v239 = vpack.c.b16 %v237, %v237
  %vm241 = vcmask 146432
  %v243 = vsel %vm241, %v49, 0
  %vm245 = vcmask 1040384
  %v247 = vsel %vm245, %v239, 0
  %249 = vmatprep.subr.bf16.mxu0 0
  %250 = vmatpush1.bf16.msra.mxu0 %v238
  %251 = vmatprep.subr.bf16.mxu0 0
  %252 = vmatpush1.bf16.msra.mxu0 %v247
  %253 = vmatprep.subr.bf16.mxu0 0
  %254 = vmatpush1.bf16.msra.mxu0 0
  %255 = vmatprep.subr.bf16.mxu0 0
  %256 = vmatpush1.bf16.msra.mxu0 0
  %257 = vmatprep.subr.bf16.mxu0 0
  %258 = vmatpush1.bf16.msra.mxu0 0
  %259 = vmatprep.subr.bf16.mxu0 0
  %260 = vmatpush1.bf16.msra.mxu0 0
  %261 = vmatprep.subr.bf16.mxu0 0
  %262 = vmatpush1.bf16.msra.mxu0 0
  %263 = vmatprep.subr.bf16.mxu0 0
  %264 = vmatpush1.bf16.msra.mxu0 0
  %265 = vmatprep.subr.bf16.mxu0 0
  %266 = vmatpush1.bf16.msra.mxu0 0
  %267 = vmatprep.subr.bf16.mxu0 0
  %268 = vmatpush1.bf16.msra.mxu0 0
  %269 = vmatprep.subr.bf16.mxu0 0
  %270 = vmatpush1.bf16.msra.mxu0 0
  %271 = vmatprep.subr.bf16.mxu0 0
  %272 = vmatpush1.bf16.msra.mxu0 0
  %273 = vmatprep.subr.bf16.mxu0 0
  %274 = vmatpush1.bf16.msra.mxu0 0
  %275 = vmatprep.subr.bf16.mxu0 0
  %276 = vmatpush1.bf16.msra.mxu0 0
  %277 = vmatprep.subr.bf16.mxu0 0
  %278 = vmatpush1.bf16.msra.mxu0 0
  %279 = vmatprep.subr.bf16.mxu0 0
  %280 = vmatpush1.bf16.msra.mxu0 0
  %281 = vmatprep.mubr.bf16.mxu0 0
  %282 = vmatmul.mubr.bf16.gmra.mrb[0].mxu0 %v243
  %v283 = vpop.f32.mrb[0].mxu0
  %v284 = vadd.f32 0.0, %v283
  %v285 = vpop.f32.mrb[0].mxu0
  %v286 = vpop.f32.mrb[0].mxu0
  %v287 = vpop.f32.mrb[0].mxu0
  %288 = vdwg.mxu0
  %v289 = vadd.f32 %v228, %v284
  %v290 = vld [vmem:[%s7] sm:$0x1]
  %v292 = vlaneseq
  %v293 = vshrl.u32 %v292, 7
  %v294 = vsub.s32 0, %v293
  %v295 = vrot.slane %v290, %v294
  %v297 = vadd.f32 %v289, %v295
  %v298 = vmax.f32 %v297, 0.0
  %v299 = vpack.c.bf16 %v298, %v298
  %v300 = vld [vmem:[%s8] sm:$0xf]
  %v301 = vld [vmem:[%s8 + $0x4] sm:$0xf]
  %v302 = vld [vmem:[%s8 + $0x8] sm:$0xf]
  %v303 = vld [vmem:[%s8 + $0xc] sm:$0xf]
  %v304 = vld [vmem:[%s8 + $0x10] sm:$0xf]
  %v305 = vld [vmem:[%s8 + $0x14] sm:$0xf]
  %v306 = vld [vmem:[%s8 + $0x18] sm:$0xf]
  %v307 = vld [vmem:[%s8 + $0x1c] sm:$0xf]
  %v308 = vld [vmem:[%s8 + $0x20] sm:$0xf]
  %v309 = vld [vmem:[%s8 + $0x24] sm:$0xf]
  %v310 = vld [vmem:[%s8 + $0x28] sm:$0xf]
  %v311 = vld [vmem:[%s8 + $0x2c] sm:$0xf]
  %v312 = vld [vmem:[%s8 + $0x30] sm:$0xf]
  %v313 = vld [vmem:[%s8 + $0x34] sm:$0xf]
  %v314 = vld [vmem:[%s8 + $0x38] sm:$0xf]
  %v315 = vld [vmem:[%s8 + $0x3c] sm:$0xf]
  %v316 = vld [vmem:[%s9] sm:$0x1]
  %v318 = vlaneseq
  %v319 = vshrl.u32 %v318, 7
  %v320 = vsub.s32 0, %v319
  %v321 = vrot.slane %v316, %v320
  %v339 = vunpack.c.l.b16 %v300
  %v340 = vunpack.c.l.b16 %v301
  %v341 = vunpack.c.l.b16 %v302
  %v342 = vunpack.c.l.b16 %v303
  %v343 = vunpack.c.l.b16 %v304
  %v344 = vunpack.c.l.b16 %v305
  %v345 = vunpack.c.l.b16 %v306
  %v346 = vunpack.c.l.b16 %v307
  %v347 = vunpack.c.l.b16 %v308
  %v348 = vunpack.c.l.b16 %v309
  %v349 = vunpack.c.l.b16 %v310
  %v350 = vunpack.c.l.b16 %v311
  %v351 = vunpack.c.l.b16 %v312
  %v352 = vunpack.c.l.b16 %v313
  %v353 = vunpack.c.l.b16 %v314
  %v354 = vunpack.c.l.b16 %v315
  %v355 = vpack.c.b16 %v340, %v339
  %v356 = vpack.c.b16 %v342, %v341
  %v357 = vpack.c.b16 %v344, %v343
  %v358 = vpack.c.b16 %v346, %v345
  %v359 = vpack.c.b16 %v348, %v347
  %v360 = vpack.c.b16 %v350, %v349
  %v361 = vpack.c.b16 %v352, %v351
  %v362 = vpack.c.b16 %v354, %v353
  %371 = vmatprep.subr.bf16.mxu0 0
  %372 = vmatpush1.bf16.msra.mxu0 %v355
  %373 = vmatprep.subr.bf16.mxu0 0
  %374 = vmatpush1.bf16.msra.mxu0 %v356
  %375 = vmatprep.subr.bf16.mxu0 0
  %376 = vmatpush1.bf16.msra.mxu0 %v357
  %377 = vmatprep.subr.bf16.mxu0 0
  %378 = vmatpush1.bf16.msra.mxu0 %v358
  %379 = vmatprep.subr.bf16.mxu0 0
  %380 = vmatpush1.bf16.msra.mxu0 %v359
  %381 = vmatprep.subr.bf16.mxu0 0
  %382 = vmatpush1.bf16.msra.mxu0 %v360
  %383 = vmatprep.subr.bf16.mxu0 0
  %384 = vmatpush1.bf16.msra.mxu0 %v361
  %385 = vmatprep.subr.bf16.mxu0 0
  %386 = vmatpush1.bf16.msra.mxu0 %v362
  %387 = vmatprep.subr.bf16.mxu0 0
  %388 = vmatpush1.bf16.msra.mxu0 0
  %389 = vmatprep.subr.bf16.mxu0 0
  %390 = vmatpush1.bf16.msra.mxu0 0
  %391 = vmatprep.subr.bf16.mxu0 0
  %392 = vmatpush1.bf16.msra.mxu0 0
  %393 = vmatprep.subr.bf16.mxu0 0
  %394 = vmatpush1.bf16.msra.mxu0 0
  %395 = vmatprep.subr.bf16.mxu0 0
  %396 = vmatpush1.bf16.msra.mxu0 0
  %397 = vmatprep.subr.bf16.mxu0 0
  %398 = vmatpush1.bf16.msra.mxu0 0
  %399 = vmatprep.subr.bf16.mxu0 0
  %400 = vmatpush1.bf16.msra.mxu0 0
  %401 = vmatprep.subr.bf16.mxu0 0
  %402 = vmatpush1.bf16.msra.mxu0 0
  %403 = vmatprep.mubr.bf16.mxu0 0
  %404 = vmatmul.mubr.bf16.gmra.mrb[0].mxu0 %v299
  %v405 = vpop.f32.mrb[0].mxu0
  %v406 = vadd.f32 %v321, %v405
  %v407 = vpop.f32.mrb[0].mxu0
  %v408 = vpop.f32.mrb[0].mxu0
  %v409 = vpop.f32.mrb[0].mxu0
  %410 = vdwg.mxu0
  %v411 = vmax.f32 %v406, 0.0
  %v412 = vpack.c.bf16 %v411, %v411
  %v413 = vld [vmem:[%s10] sm:$0xf]
  %v414 = vld [vmem:[%s10 + $0x4] sm:$0xf]
  %v415 = vld [vmem:[%s10 + $0x8] sm:$0xf]
  %v416 = vld [vmem:[%s10 + $0xc] sm:$0xf]
  %v417 = vld [vmem:[%s10 + $0x10] sm:$0xf]
  %v418 = vld [vmem:[%s10 + $0x14] sm:$0xf]
  %v419 = vld [vmem:[%s10 + $0x18] sm:$0xf]
  %v420 = vld [vmem:[%s10 + $0x1c] sm:$0xf]
  %v421 = vld [vmem:[%s11] sm:$0x1]
  %v423 = vlaneseq
  %v424 = vshrl.u32 %v423, 7
  %v425 = vsub.s32 0, %v424
  %v426 = vrot.slane %v421, %v425
  %v436 = vunpack.c.l.b16 %v413
  %v437 = vunpack.c.l.b16 %v414
  %v438 = vunpack.c.l.b16 %v415
  %v439 = vunpack.c.l.b16 %v416
  %v440 = vunpack.c.l.b16 %v417
  %v441 = vunpack.c.l.b16 %v418
  %v442 = vunpack.c.l.b16 %v419
  %v443 = vunpack.c.l.b16 %v420
  %v444 = vpack.c.b16 %v437, %v436
  %v445 = vpack.c.b16 %v439, %v438
  %v446 = vpack.c.b16 %v441, %v440
  %v447 = vpack.c.b16 %v443, %v442
  %vm452 = vcmask 523264
  %v454 = vsel %vm452, %v412, 0
  %456 = vmatprep.subr.bf16.mxu0 0
  %457 = vmatpush1.bf16.msra.mxu0 %v444
  %458 = vmatprep.subr.bf16.mxu0 0
  %459 = vmatpush1.bf16.msra.mxu0 %v445
  %460 = vmatprep.subr.bf16.mxu0 0
  %461 = vmatpush1.bf16.msra.mxu0 %v446
  %462 = vmatprep.subr.bf16.mxu0 0
  %463 = vmatpush1.bf16.msra.mxu0 %v447
  %464 = vmatprep.subr.bf16.mxu0 0
  %465 = vmatpush1.bf16.msra.mxu0 0
  %466 = vmatprep.subr.bf16.mxu0 0
  %467 = vmatpush1.bf16.msra.mxu0 0
  %468 = vmatprep.subr.bf16.mxu0 0
  %469 = vmatpush1.bf16.msra.mxu0 0
  %470 = vmatprep.subr.bf16.mxu0 0
  %471 = vmatpush1.bf16.msra.mxu0 0
  %472 = vmatprep.subr.bf16.mxu0 0
  %473 = vmatpush1.bf16.msra.mxu0 0
  %474 = vmatprep.subr.bf16.mxu0 0
  %475 = vmatpush1.bf16.msra.mxu0 0
  %476 = vmatprep.subr.bf16.mxu0 0
  %477 = vmatpush1.bf16.msra.mxu0 0
  %478 = vmatprep.subr.bf16.mxu0 0
  %479 = vmatpush1.bf16.msra.mxu0 0
  %480 = vmatprep.subr.bf16.mxu0 0
  %481 = vmatpush1.bf16.msra.mxu0 0
  %482 = vmatprep.subr.bf16.mxu0 0
  %483 = vmatpush1.bf16.msra.mxu0 0
  %484 = vmatprep.subr.bf16.mxu0 0
  %485 = vmatpush1.bf16.msra.mxu0 0
  %486 = vmatprep.subr.bf16.mxu0 0
  %487 = vmatpush1.bf16.msra.mxu0 0
  %488 = vmatprep.mubr.bf16.mxu0 0
  %489 = vmatmul.mubr.bf16.gmra.mrb[0].mxu0 %v454
  %v490 = vpop.f32.mrb[0].mxu0
  %v491 = vadd.f32 %v426, %v490
  %v492 = vpop.f32.mrb[0].mxu0
  %v493 = vpop.f32.mrb[0].mxu0
  %v494 = vpop.f32.mrb[0].mxu0
  %495 = vdwg.mxu0
  %vm496 = vcmask 31744
  %497 = vst.msk [vmem:[%s12] sm:$0xff] %vm496, %v491
  // Predicated region
  $region50: #{ordtri_forward.1} parent=0 // pred_check
    _
  $region51: #{ordtri_forward.1} parent=0 // pred_check_branch
    %499 = sbr.rel (0) target = $region53
  $region52: #{ordtri_forward.1} parent=0 // pred_region
    _
  $region53: #{ordtri_forward.1} parent=0 // pred_fallthru
    _
  // Predicated region
  $region54: #{ordtri_forward.1} parent=0 // pred_check
    _
  $region55: #{ordtri_forward.1} parent=0 // pred_check_branch
    %501 = sbr.rel (0) target = $region57
  $region56: #{ordtri_forward.1} parent=0 // pred_region
    _
  $region57: #{ordtri_forward.1} parent=0 // pred_fallthru
    _

</llo_original>
